<compile_context>
chip_gen: v5e
topology: v5e:2x2
jax: 0.10.0
libtpu: 0.0.40
codegen_flags: <defaults>
</compile_context>

<pallas_src>
import jax
import jax.numpy as jnp
from jax.experimental import pallas as pl
from jax.experimental.pallas import tpu as pltpu

# ----- synthetic config (small) -----
B = 2                  # real (small) batch for the main check
HIDDEN = 32            # pretrained_model.config.hidden_size (synthetic)
C1 = 8                 # cnn_num_channels
K1 = 5                 # cnn_kernel_size
P1 = 2                 # cnn_padding
C2 = C1 // 2           # second conv channels
K2 = K1 // 2           # second conv kernel
P2 = P1 // 2           # second conv padding
NUM_CLASSES = 4
FC1_OUT = 512
FC2_OUT = 256

L1 = HIDDEN + 2 * P1 - K1 + 1      # conv1 output length (32)
L2 = L1 + 2 * P2 - K2 + 1          # conv2 output length (33)

# rows of the packed bias/scale buffer
_ROW_B1, _ROW_B2, _ROW_BF1, _ROW_BF2, _ROW_BF3, _ROW_S2 = range(6)

_PREC = jax.lax.Precision.HIGHEST  # reference only


def _round_up(n, m):
    return -(-n // m) * m


# =======================  Pallas kernel  =======================
def cls_kernel(x_ref, m1_ref, m2_ref, wf1_ref, wf2_ref, wf3_ref, bias_ref,
               out_ref):
    f32, bf16 = jnp.float32, jnp.bfloat16
    M = x_ref.shape[0]

    b1 = bias_ref[_ROW_B1:_ROW_B1 + 1, :C1 * L1]          # [1, 256]
    b2 = bias_ref[_ROW_B2:_ROW_B2 + 1, :C2 * L2]          # [1, 132]
    bf1 = bias_ref[_ROW_BF1:_ROW_BF1 + 1, :FC1_OUT]        # [1, 512]
    bf2 = bias_ref[_ROW_BF2:_ROW_BF2 + 1, :FC2_OUT]        # [1, 256]
    bf3 = bias_ref[_ROW_BF3:_ROW_BF3 + 1, :NUM_CLASSES]    # [1, 4]
    s2 = bias_ref[_ROW_S2:_ROW_S2 + 1, :FC2_OUT]           # [1, 256] fc2 dequant scale

    # ---- Conv1d #1 (1 -> C1, k=K1, pad=P1) as one MXU matmul + bias + ReLU ----
    x = x_ref[...].astype(bf16)                                    # [M, HIDDEN]
    h1 = jnp.dot(x, m1_ref[...], preferred_element_type=f32)       # [M, C1*L1]
    h1 = jnp.maximum(h1 + b1, 0.0)

    # ---- Conv1d #2 (C1 -> C2, k=K2, pad=P2) as one MXU matmul + bias + ReLU ----
    h2 = jnp.dot(h1.astype(bf16), m2_ref[...],
                 preferred_element_type=f32)                       # [M, C2*L2]
    h2 = jnp.maximum(h2 + b2, 0.0)

    # ---- full-length max_pool1d fused with fc1 (C2 = 4 -> VPU broadcast-MAC) ----
    # masked max over the full lane-dense block (no unaligned lane slices);
    # h2 >= 0 after ReLU, so a 0.0 fill is equivalent to masking with -inf.
    col = jax.lax.broadcasted_iota(jnp.int32, (M, C2 * L2), 1)
    wf1 = wf1_ref[...]                                             # [C2, 512] f32
    acc = jnp.zeros((M, FC1_OUT), f32) + bf1
    for c in range(C2):                                            # 4 static iters
        in_chan = (col >= c * L2) & (col < (c + 1) * L2)
        pooled_c = jnp.max(jnp.where(in_chan, h2, 0.0), axis=1, keepdims=True)
        acc = acc + pooled_c * wf1[c:c + 1, :]
    y = jnp.maximum(acc, 0.0)                                      # [M, 512]

    # ---- fc2: int8 weight dequantized to bf16 (exact), per-column f32 scale
    #      applied after the f32-accumulated dot; dropout = identity ----
    w2b = wf2_ref[...].astype(f32).astype(bf16)                    # [512, 256]
    z = jnp.dot(y.astype(bf16), w2b, preferred_element_type=f32) * s2 + bf2
    z = jnp.maximum(z, 0.0)                                        # [M, 256]

    # ---- fc3 (bf16 weights, f32 accumulation) ----
    logits = jnp.dot(z.astype(bf16), wf3_ref[...],
                     preferred_element_type=f32) + bf3             # [M, NC]

    # ---- log_softmax over classes (f32, classes on lanes) ----
    m = jnp.max(logits, axis=1, keepdims=True)
    s = logits - m
    lse = jnp.log(jnp.sum(jnp.exp(s), axis=1, keepdims=True))
    out_ref[...] = s - lse


# =======================  one-time weight lowering  =======================
def _conv1_as_matrix(w1):
    """[C1,1,K1] Conv1d weight -> dense [HIDDEN, C1*L1] matrix (pad folded in)."""
    w1k = w1[:, 0, :]                                  # [C1, K1]
    h = jnp.arange(HIDDEN)[:, None]
    l = jnp.arange(L1)[None, :]
    t = h - l + P1                                     # [HIDDEN, L1]
    valid = (t >= 0) & (t < K1)
    m = w1k[:, jnp.clip(t, 0, K1 - 1)]                 # [C1, HIDDEN, L1]
    m = jnp.where(valid[None], m, 0.0)
    return jnp.transpose(m, (1, 0, 2)).reshape(HIDDEN, C1 * L1)


def _conv2_as_matrix(w2):
    """[C2,C1,K2] Conv1d weight -> dense [C1*L1, C2*L2] matrix (pad folded in)."""
    l1 = jnp.arange(L1)[:, None]
    l2 = jnp.arange(L2)[None, :]
    t = l1 - l2 + P2                                   # [L1, L2]
    valid = (t >= 0) & (t < K2)
    m = w2[:, :, jnp.clip(t, 0, K2 - 1)]               # [C2, C1, L1, L2]
    m = jnp.where(valid[None, None], m, 0.0)
    return jnp.transpose(m, (1, 2, 0, 3)).reshape(C1 * L1, C2 * L2)


def _quantize_wf2(wf2):
    """Per-output-column symmetric int8 quantization of the fc2 weight."""
    wt = wf2.T.astype(jnp.float32)                                    # [512, 256]
    s = jnp.maximum(jnp.max(jnp.abs(wt), axis=0, keepdims=True), 1e-12) / 127.0
    q = jnp.clip(jnp.round(wt / s), -127, 127).astype(jnp.int8)
    return q, s                                                       # i8, [1,256]


def prepare_params(w1, b1, w2, b2, wf1, bf1, wf2, bf2, wf3, bf3):
    """One-time (per model load) lowering of PyTorch-layout params."""
    bf16 = jnp.bfloat16
    m1 = _conv1_as_matrix(w1).astype(bf16)                 # [HIDDEN, C1*L1]
    m2 = _conv2_as_matrix(w2).astype(bf16)                 # [C1*L1, C2*L2]
    wf1_t = wf1.T.astype(jnp.float32)                      # [C2, 512] (VPU path)
    wf2_i8, s2 = _quantize_wf2(wf2)                        # [512,256] i8, [1,256] f32
    wf3_t = wf3.T.astype(bf16)                             # [256, NC]

    # all biases + fc2 scale packed into one f32 VMEM buffer (one DMA)
    bias = jnp.zeros((8, FC1_OUT), jnp.float32)
    bias = bias.at[_ROW_B1, :C1 * L1].set(jnp.repeat(b1, L1))
    bias = bias.at[_ROW_B2, :C2 * L2].set(jnp.repeat(b2, L2))
    bias = bias.at[_ROW_BF1, :FC1_OUT].set(bf1)
    bias = bias.at[_ROW_BF2, :FC2_OUT].set(bf2)
    bias = bias.at[_ROW_BF3, :NUM_CLASSES].set(bf3)
    bias = bias.at[_ROW_S2, :FC2_OUT].set(s2[0])
    return (m1, m2, wf1_t, wf2_i8, wf3_t, bias)


# =======================  forward wrapper  =======================
def cls_forward(x, lowered, m_tile=256):
    """x: [nb, HIDDEN] pooled embeddings; lowered: output of prepare_params."""
    m1, m2, wf1_t, wf2_i8, wf3_t, bias = lowered
    nb = x.shape[0]
    m_tile = min(m_tile, max(8, _round_up(nb, 8)))         # sublane-aligned tile
    m_pad = _round_up(nb, m_tile)
    x_pad = jnp.zeros((m_pad, HIDDEN), jnp.float32).at[:nb].set(x)

    grid = (m_pad // m_tile,)
    in_specs = [
        pl.BlockSpec((m_tile, HIDDEN), lambda i: (i, 0)),   # activations tile
        pl.BlockSpec(m1.shape, lambda i: (0, 0)),           # weights: constant
        pl.BlockSpec(m2.shape, lambda i: (0, 0)),           # index_map -> stay
        pl.BlockSpec(wf1_t.shape, lambda i: (0, 0)),        # VMEM-resident
        pl.BlockSpec(wf2_i8.shape, lambda i: (0, 0)),
        pl.BlockSpec(wf3_t.shape, lambda i: (0, 0)),
        pl.BlockSpec(bias.shape, lambda i: (0, 0)),
    ]
    out_specs = pl.BlockSpec((m_tile, NUM_CLASSES), lambda i: (i, 0))

    out = pl.pallas_call(
        cls_kernel,
        out_shape=jax.ShapeDtypeStruct((m_pad, NUM_CLASSES), jnp.float32),
        grid=grid,
        in_specs=in_specs,
        out_specs=out_specs,
        compiler_params=pltpu.CompilerParams(
            dimension_semantics=("parallel",)),             # both TCs on v7x
    )(x_pad, m1, m2, wf1_t, wf2_i8, wf3_t, bias)
    return out[:nb]


# =======================  references  =======================
def reference(x, w1, b1, w2, b2, wf1, bf1, wf2, bf2, wf3, bf3):
    """Pure-JAX f32 reference with PyTorch semantics (eval mode)."""
    f32 = jnp.float32
    nb = x.shape[0]
    xp = jnp.pad(x, ((0, 0), (P1, P1)))
    h1 = jnp.zeros((nb, C1, L1), f32)
    for t in range(K1):
        h1 = h1 + w1[None, :, 0, t:t + 1] * xp[:, None, t:t + L1]
    h1 = jax.nn.relu(h1 + b1[None, :, None])

    hp = jnp.pad(h1, ((0, 0), (0, 0), (P2, P2)))
    h2 = jnp.zeros((nb, C2, L2), f32)
    for t in range(K2):
        h2 = h2 + jnp.einsum('bcl,dc->bdl', hp[:, :, t:t + L2], w2[:, :, t],
                             precision=_PREC)
    h2 = jax.nn.relu(h2 + b2[None, :, None])

    pooled = jnp.max(h2, axis=2)                                        # [nb, C2]
    y = jax.nn.relu(jnp.dot(pooled, wf1.T, precision=_PREC) + bf1)
    z = jax.nn.relu(jnp.dot(y, wf2.T, precision=_PREC) + bf2)
    logits = jnp.dot(z, wf3.T, precision=_PREC) + bf3
    return jax.nn.log_softmax(logits, axis=1)


def reference_matched(x, w1, b1, w2, b2, wf1, bf1, wf2, bf2, wf3, bf3):
    """Mirrors the kernel numerics: bf16 MXU inputs, int8 fc2 weight with a
    per-column scale applied after the dot, f32 element-wise math."""
    f32 = jnp.float32
    q = lambda a: a.astype(jnp.bfloat16).astype(f32)
    nb = x.shape[0]

    xp = jnp.pad(q(x), ((0, 0), (P1, P1)))
    w1q = q(w1)
    h1 = jnp.zeros((nb, C1, L1), f32)
    for t in range(K1):
        h1 = h1 + w1q[None, :, 0, t:t + 1] * xp[:, None, t:t + L1]
    h1 = jax.nn.relu(h1 + b1[None, :, None])

    hp = jnp.pad(q(h1), ((0, 0), (0, 0), (P2, P2)))
    w2q = q(w2)
    h2 = jnp.zeros((nb, C2, L2), f32)
    for t in range(K2):
        h2 = h2 + jnp.einsum('bcl,dc->bdl', hp[:, :, t:t + L2], w2q[:, :, t],
                             precision=_PREC)
    h2 = jax.nn.relu(h2 + b2[None, :, None])

    pooled = jnp.max(h2, axis=2)
    y = jax.nn.relu(jnp.dot(pooled, wf1.T, precision=_PREC) + bf1)      # fc1 f32

    wf2_i8, s2 = _quantize_wf2(wf2)
    z = jnp.dot(q(y), wf2_i8.astype(f32), precision=_PREC) * s2 + bf2
    z = jax.nn.relu(z)
    logits = jnp.dot(q(z), q(wf3).T, precision=_PREC) + bf3
    return jax.nn.log_softmax(logits, axis=1)


# =======================  test driver  =======================
if __name__ == "__main__":
    key = jax.random.PRNGKey(0)
    ks = jax.random.split(key, 12)

    # deterministic synthetic parameters (PyTorch shapes)
    x   = jax.random.normal(ks[0], (B, HIDDEN), jnp.float32)          # pooled embedding
    w1  = jax.random.normal(ks[1], (C1, 1, K1), jnp.float32) / (K1 ** 0.5)
    b1  = jax.random.normal(ks[2], (C1,), jnp.float32) * 0.1
    w2  = jax.random.normal(ks[3], (C2, C1, K2), jnp.float32) / ((C1 * K2) ** 0.5)
    b2  = jax.random.normal(ks[4], (C2,), jnp.float32) * 0.1
    wf1 = jax.random.normal(ks[5], (FC1_OUT, C2), jnp.float32) / (C2 ** 0.5)
    bf1 = jax.random.normal(ks[6], (FC1_OUT,), jnp.float32) * 0.1
    wf2 = jax.random.normal(ks[7], (FC2_OUT, FC1_OUT), jnp.float32) / (FC1_OUT ** 0.5)
    bf2 = jax.random.normal(ks[8], (FC2_OUT,), jnp.float32) * 0.1
    wf3 = jax.random.normal(ks[9], (NUM_CLASSES, FC2_OUT), jnp.float32) / (FC2_OUT ** 0.5)
    bf3 = jax.random.normal(ks[10], (NUM_CLASSES,), jnp.float32) * 0.1

    params = (w1, b1, w2, b2, wf1, bf1, wf2, bf2, wf3, bf3)

    # one-time weight lowering (hoisted out of the forward path)
    lowered = jax.tree_util.tree_map(jax.block_until_ready, prepare_params(*params))

    # ---- small-batch forward (single grid step) ----
    out = jax.block_until_ready(cls_forward(x, lowered))
    assert out.shape == (B, NUM_CLASSES)
    assert bool(jnp.all(jnp.isfinite(out)))

    # 1) structural check vs. a reference with identical quantization
    ref_q = reference_matched(x, *params)
    diff_q = jnp.max(jnp.abs(out - ref_q))
    assert jnp.allclose(out, ref_q, atol=1e-2, rtol=1e-2), (
        f"max abs diff vs quantization-matched ref: {diff_q}")

    # 2) drift check vs. the full-f32 PyTorch-semantics reference
    #    (bounded drift is expected from the intentional bf16/int8 weight cast)
    ref_f = reference(x, *params)
    diff_f = jnp.max(jnp.abs(out - ref_f))
    assert diff_f < 0.3, f"weight quantization drift too large: {diff_f}"

    # ---- batched forward exercising the grid + parallel batch axis ----
    xb = jax.random.normal(ks[11], (512, HIDDEN), jnp.float32)
    out_b = jax.block_until_ready(cls_forward(xb, lowered, m_tile=256))  # grid=(2,)
    assert out_b.shape == (512, NUM_CLASSES)
    ref_b = reference_matched(xb, *params)
    diff_b = jnp.max(jnp.abs(out_b - ref_b))
    assert jnp.allclose(out_b, ref_b, atol=1e-2, rtol=1e-2), (
        f"batched max abs diff vs quantization-matched ref: {diff_b}")

    print("KERNEL_OK")
</pallas_src>

<mosaic_0001>
module attributes {stable_mosaic.version = 11 : i64} {
  func.func @cls_kernel(%arg0: i32, %arg1: memref<8x32xf32, #tpu.memory_space<vmem>>, %arg2: memref<32x256xbf16, #tpu.memory_space<vmem>>, %arg3: memref<256x132xbf16, #tpu.memory_space<vmem>>, %arg4: memref<4x512xf32, #tpu.memory_space<vmem>>, %arg5: memref<512x256xi8, #tpu.memory_space<vmem>>, %arg6: memref<256x4xbf16, #tpu.memory_space<vmem>>, %arg7: memref<8x512xf32, #tpu.memory_space<vmem>>, %arg8: memref<8x4xf32, #tpu.memory_space<vmem>>) attributes {dimension_semantics = [#tpu.dimension_semantics<parallel>], iteration_bounds = array<i64: 1>, scalar_prefetch = 0 : i64, scratch_operands = 0 : i64, tpu.core_type = #tpu.core_type<tc>, window_params = [{transform_indices = @transform_0, window_bounds = array<i64: 8, 32>}, {pipeline_mode = #tpu.pipeline_mode<synchronous>, transform_indices = @transform_1, window_bounds = array<i64: 32, 256>}, {pipeline_mode = #tpu.pipeline_mode<synchronous>, transform_indices = @transform_2, window_bounds = array<i64: 256, 132>}, {pipeline_mode = #tpu.pipeline_mode<synchronous>, transform_indices = @transform_3, window_bounds = array<i64: 4, 512>}, {pipeline_mode = #tpu.pipeline_mode<synchronous>, transform_indices = @transform_4, window_bounds = array<i64: 512, 256>}, {pipeline_mode = #tpu.pipeline_mode<synchronous>, transform_indices = @transform_5, window_bounds = array<i64: 256, 4>}, {pipeline_mode = #tpu.pipeline_mode<synchronous>, transform_indices = @transform_6, window_bounds = array<i64: 8, 512>}, {transform_indices = @transform_7, window_bounds = array<i64: 8, 4>}]} {
    %c0 = arith.constant 0 : index
    %c0_0 = arith.constant 0 : index
    %0 = vector.load %arg7[%c0, %c0_0] : memref<8x512xf32, #tpu.memory_space<vmem>>, vector<1x256xf32>
    %c1 = arith.constant 1 : index
    %c0_1 = arith.constant 0 : index
    %1 = vector.load %arg7[%c1, %c0_1] : memref<8x512xf32, #tpu.memory_space<vmem>>, vector<1x132xf32>
    %c2 = arith.constant 2 : index
    %c0_2 = arith.constant 0 : index
    %2 = vector.load %arg7[%c2, %c0_2] : memref<8x512xf32, #tpu.memory_space<vmem>>, vector<1x512xf32>
    %c3 = arith.constant 3 : index
    %c0_3 = arith.constant 0 : index
    %3 = vector.load %arg7[%c3, %c0_3] : memref<8x512xf32, #tpu.memory_space<vmem>>, vector<1x256xf32>
    %c4 = arith.constant 4 : index
    %c0_4 = arith.constant 0 : index
    %4 = vector.load %arg7[%c4, %c0_4] : memref<8x512xf32, #tpu.memory_space<vmem>>, vector<1x4xf32>
    %c5 = arith.constant 5 : index
    %c0_5 = arith.constant 0 : index
    %5 = vector.load %arg7[%c5, %c0_5] : memref<8x512xf32, #tpu.memory_space<vmem>>, vector<1x256xf32>
    %c0_6 = arith.constant 0 : index
    %c0_7 = arith.constant 0 : index
    %6 = vector.load %arg1[%c0_6, %c0_7] : memref<8x32xf32, #tpu.memory_space<vmem>>, vector<8x32xf32>
    %7 = arith.truncf %6 : vector<8x32xf32> to vector<8x32xbf16>
    %c0_8 = arith.constant 0 : index
    %c0_9 = arith.constant 0 : index
    %8 = vector.load %arg2[%c0_8, %c0_9] : memref<32x256xbf16, #tpu.memory_space<vmem>>, vector<32x256xbf16>
    %cst = arith.constant dense<0.000000e+00> : vector<8x256xf32>
    %9 = tpu.matmul %7, %8, %cst {dimension_numbers = #tpu.dot_dimension_numbers<[1], [0], [0], [1], [0, 0, 1, 1], [], []>} : vector<8x32xbf16>, vector<32x256xbf16>, vector<8x256xf32> -> vector<8x256xf32>
    %10 = vector.broadcast %0 : vector<1x256xf32> to vector<8x256xf32>
    %11 = arith.addf %9, %10 : vector<8x256xf32>
    %cst_10 = arith.constant 0.000000e+00 : f32
    %12 = vector.broadcast %cst_10 : f32 to vector<8x256xf32>
    %13 = arith.maximumf %11, %12 : vector<8x256xf32>
    %14 = arith.truncf %13 : vector<8x256xf32> to vector<8x256xbf16>
    %c0_11 = arith.constant 0 : index
    %c0_12 = arith.constant 0 : index
    %15 = vector.load %arg3[%c0_11, %c0_12] : memref<256x132xbf16, #tpu.memory_space<vmem>>, vector<256x132xbf16>
    %cst_13 = arith.constant dense<0.000000e+00> : vector<8x132xf32>
    %16 = tpu.matmul %14, %15, %cst_13 {dimension_numbers = #tpu.dot_dimension_numbers<[1], [0], [0], [1], [0, 0, 1, 1], [], []>} : vector<8x256xbf16>, vector<256x132xbf16>, vector<8x132xf32> -> vector<8x132xf32>
    %17 = vector.broadcast %1 : vector<1x132xf32> to vector<8x132xf32>
    %18 = arith.addf %16, %17 : vector<8x132xf32>
    %cst_14 = arith.constant 0.000000e+00 : f32
    %19 = vector.broadcast %cst_14 : f32 to vector<8x132xf32>
    %20 = arith.maximumf %18, %19 : vector<8x132xf32>
    %21 = tpu.iota {dimensions = array<i32: 1>} : vector<8x132xi32>
    %c0_15 = arith.constant 0 : index
    %c0_16 = arith.constant 0 : index
    %22 = vector.load %arg4[%c0_15, %c0_16] : memref<4x512xf32, #tpu.memory_space<vmem>>, vector<4x512xf32>
    %cst_17 = arith.constant 0.000000e+00 : f32
    %23 = vector.broadcast %cst_17 : f32 to vector<8x512xf32>
    %24 = vector.broadcast %2 : vector<1x512xf32> to vector<8x512xf32>
    %25 = arith.addf %23, %24 : vector<8x512xf32>
    %c0_i32 = arith.constant 0 : i32
    %26 = vector.broadcast %c0_i32 : i32 to vector<8x132xi32>
    %27 = arith.cmpi sge, %21, %26 : vector<8x132xi32>
    %c33_i32 = arith.constant 33 : i32
    %28 = vector.broadcast %c33_i32 : i32 to vector<8x132xi32>
    %29 = arith.cmpi slt, %21, %28 : vector<8x132xi32>
    %30 = arith.andi %27, %29 : vector<8x132xi1>
    %cst_18 = arith.constant 0.000000e+00 : f32
    %31 = vector.broadcast %cst_18 : f32 to vector<8x132xf32>
    %32 = arith.select %30, %20, %31 : vector<8x132xi1>, vector<8x132xf32>
    %cst_19 = arith.constant dense<0xFF800000> : vector<8xf32>
    %33 = vector.multi_reduction <maximumf>, %32, %cst_19 [1] : vector<8x132xf32> to vector<8xf32>
    %34 = vector.shape_cast %33 : vector<8xf32> to vector<8x1xf32>
    %35 = vector.extract_strided_slice %22 {offsets = [0, 0], sizes = [1, 512], strides = [1, 1]} : vector<4x512xf32> to vector<1x512xf32>
    %36 = vector.broadcast %34 : vector<8x1xf32> to vector<8x512xf32>
    %37 = vector.broadcast %35 : vector<1x512xf32> to vector<8x512xf32>
    %38 = arith.mulf %36, %37 : vector<8x512xf32>
    %39 = arith.addf %25, %38 : vector<8x512xf32>
    %c33_i32_20 = arith.constant 33 : i32
    %40 = vector.broadcast %c33_i32_20 : i32 to vector<8x132xi32>
    %41 = arith.cmpi sge, %21, %40 : vector<8x132xi32>
    %c66_i32 = arith.constant 66 : i32
    %42 = vector.broadcast %c66_i32 : i32 to vector<8x132xi32>
    %43 = arith.cmpi slt, %21, %42 : vector<8x132xi32>
    %44 = arith.andi %41, %43 : vector<8x132xi1>
    %cst_21 = arith.constant 0.000000e+00 : f32
    %45 = vector.broadcast %cst_21 : f32 to vector<8x132xf32>
    %46 = arith.select %44, %20, %45 : vector<8x132xi1>, vector<8x132xf32>
    %cst_22 = arith.constant dense<0xFF800000> : vector<8xf32>
    %47 = vector.multi_reduction <maximumf>, %46, %cst_22 [1] : vector<8x132xf32> to vector<8xf32>
    %48 = vector.shape_cast %47 : vector<8xf32> to vector<8x1xf32>
    %49 = vector.extract_strided_slice %22 {offsets = [1, 0], sizes = [1, 512], strides = [1, 1]} : vector<4x512xf32> to vector<1x512xf32>
    %50 = vector.broadcast %48 : vector<8x1xf32> to vector<8x512xf32>
    %51 = vector.broadcast %49 : vector<1x512xf32> to vector<8x512xf32>
    %52 = arith.mulf %50, %51 : vector<8x512xf32>
    %53 = arith.addf %39, %52 : vector<8x512xf32>
    %c66_i32_23 = arith.constant 66 : i32
    %54 = vector.broadcast %c66_i32_23 : i32 to vector<8x132xi32>
    %55 = arith.cmpi sge, %21, %54 : vector<8x132xi32>
    %c99_i32 = arith.constant 99 : i32
    %56 = vector.broadcast %c99_i32 : i32 to vector<8x132xi32>
    %57 = arith.cmpi slt, %21, %56 : vector<8x132xi32>
    %58 = arith.andi %55, %57 : vector<8x132xi1>
    %cst_24 = arith.constant 0.000000e+00 : f32
    %59 = vector.broadcast %cst_24 : f32 to vector<8x132xf32>
    %60 = arith.select %58, %20, %59 : vector<8x132xi1>, vector<8x132xf32>
    %cst_25 = arith.constant dense<0xFF800000> : vector<8xf32>
    %61 = vector.multi_reduction <maximumf>, %60, %cst_25 [1] : vector<8x132xf32> to vector<8xf32>
    %62 = vector.shape_cast %61 : vector<8xf32> to vector<8x1xf32>
    %63 = vector.extract_strided_slice %22 {offsets = [2, 0], sizes = [1, 512], strides = [1, 1]} : vector<4x512xf32> to vector<1x512xf32>
    %64 = vector.broadcast %62 : vector<8x1xf32> to vector<8x512xf32>
    %65 = vector.broadcast %63 : vector<1x512xf32> to vector<8x512xf32>
    %66 = arith.mulf %64, %65 : vector<8x512xf32>
    %67 = arith.addf %53, %66 : vector<8x512xf32>
    %c99_i32_26 = arith.constant 99 : i32
    %68 = vector.broadcast %c99_i32_26 : i32 to vector<8x132xi32>
    %69 = arith.cmpi sge, %21, %68 : vector<8x132xi32>
    %c132_i32 = arith.constant 132 : i32
    %70 = vector.broadcast %c132_i32 : i32 to vector<8x132xi32>
    %71 = arith.cmpi slt, %21, %70 : vector<8x132xi32>
    %72 = arith.andi %69, %71 : vector<8x132xi1>
    %cst_27 = arith.constant 0.000000e+00 : f32
    %73 = vector.broadcast %cst_27 : f32 to vector<8x132xf32>
    %74 = arith.select %72, %20, %73 : vector<8x132xi1>, vector<8x132xf32>
    %cst_28 = arith.constant dense<0xFF800000> : vector<8xf32>
    %75 = vector.multi_reduction <maximumf>, %74, %cst_28 [1] : vector<8x132xf32> to vector<8xf32>
    %76 = vector.shape_cast %75 : vector<8xf32> to vector<8x1xf32>
    %77 = vector.extract_strided_slice %22 {offsets = [3, 0], sizes = [1, 512], strides = [1, 1]} : vector<4x512xf32> to vector<1x512xf32>
    %78 = vector.broadcast %76 : vector<8x1xf32> to vector<8x512xf32>
    %79 = vector.broadcast %77 : vector<1x512xf32> to vector<8x512xf32>
    %80 = arith.mulf %78, %79 : vector<8x512xf32>
    %81 = arith.addf %67, %80 : vector<8x512xf32>
    %cst_29 = arith.constant 0.000000e+00 : f32
    %82 = vector.broadcast %cst_29 : f32 to vector<8x512xf32>
    %83 = arith.maximumf %81, %82 : vector<8x512xf32>
    %c0_30 = arith.constant 0 : index
    %c0_31 = arith.constant 0 : index
    %84 = vector.load %arg5[%c0_30, %c0_31] : memref<512x256xi8, #tpu.memory_space<vmem>>, vector<512x256xi8>
    %85 = arith.sitofp %84 : vector<512x256xi8> to vector<512x256xf32>
    %86 = arith.truncf %85 : vector<512x256xf32> to vector<512x256xbf16>
    %87 = arith.truncf %83 : vector<8x512xf32> to vector<8x512xbf16>
    %cst_32 = arith.constant dense<0.000000e+00> : vector<8x256xf32>
    %88 = tpu.matmul %87, %86, %cst_32 {dimension_numbers = #tpu.dot_dimension_numbers<[1], [0], [0], [1], [0, 0, 1, 1], [], []>} : vector<8x512xbf16>, vector<512x256xbf16>, vector<8x256xf32> -> vector<8x256xf32>
    %89 = vector.broadcast %5 : vector<1x256xf32> to vector<8x256xf32>
    %90 = arith.mulf %88, %89 : vector<8x256xf32>
    %91 = vector.broadcast %3 : vector<1x256xf32> to vector<8x256xf32>
    %92 = arith.addf %90, %91 : vector<8x256xf32>
    %cst_33 = arith.constant 0.000000e+00 : f32
    %93 = vector.broadcast %cst_33 : f32 to vector<8x256xf32>
    %94 = arith.maximumf %92, %93 : vector<8x256xf32>
    %95 = arith.truncf %94 : vector<8x256xf32> to vector<8x256xbf16>
    %c0_34 = arith.constant 0 : index
    %c0_35 = arith.constant 0 : index
    %96 = vector.load %arg6[%c0_34, %c0_35] : memref<256x4xbf16, #tpu.memory_space<vmem>>, vector<256x4xbf16>
    %cst_36 = arith.constant dense<0.000000e+00> : vector<8x4xf32>
    %97 = tpu.matmul %95, %96, %cst_36 {dimension_numbers = #tpu.dot_dimension_numbers<[1], [0], [0], [1], [0, 0, 1, 1], [], []>} : vector<8x256xbf16>, vector<256x4xbf16>, vector<8x4xf32> -> vector<8x4xf32>
    %98 = vector.broadcast %4 : vector<1x4xf32> to vector<8x4xf32>
    %99 = arith.addf %97, %98 : vector<8x4xf32>
    %cst_37 = arith.constant dense<0xFF800000> : vector<8xf32>
    %100 = vector.multi_reduction <maximumf>, %99, %cst_37 [1] : vector<8x4xf32> to vector<8xf32>
    %101 = vector.shape_cast %100 : vector<8xf32> to vector<8x1xf32>
    %102 = vector.broadcast %101 : vector<8x1xf32> to vector<8x4xf32>
    %103 = arith.subf %99, %102 : vector<8x4xf32>
    %104 = math.exp %103 : vector<8x4xf32>
    %cst_38 = arith.constant dense<0.000000e+00> : vector<8xf32>
    %105 = vector.multi_reduction <add>, %104, %cst_38 [1] : vector<8x4xf32> to vector<8xf32>
    %106 = vector.shape_cast %105 : vector<8xf32> to vector<8x1xf32>
    %107 = math.log %106 : vector<8x1xf32>
    %108 = vector.broadcast %107 : vector<8x1xf32> to vector<8x4xf32>
    %109 = arith.subf %103, %108 : vector<8x4xf32>
    %c0_39 = arith.constant 0 : index
    %c0_40 = arith.constant 0 : index
    %110 = vector.load %arg8[%c0_39, %c0_40] : memref<8x4xf32, #tpu.memory_space<vmem>>, vector<8x4xf32>
    tpu.vector_store %arg8[%c0_39, %c0_40], %109 {strides = array<i32>} : memref<8x4xf32, #tpu.memory_space<vmem>>, vector<8x4xf32>,
    return
  }
  func.func @transform_0(%arg0: i32) -> (i32, i32) {
    %c0_i32 = arith.constant 0 : i32
    %c0_i32_0 = arith.constant 0 : i32
    return %arg0, %c0_i32 : i32, i32
  }
  func.func @transform_1(%arg0: i32) -> (i32, i32) {
    %c0_i32 = arith.constant 0 : i32
    %c0_i32_0 = arith.constant 0 : i32
    %c0_i32_1 = arith.constant 0 : i32
    return %c0_i32, %c0_i32_0 : i32, i32
  }
  func.func @transform_2(%arg0: i32) -> (i32, i32) {
    %c0_i32 = arith.constant 0 : i32
    %c0_i32_0 = arith.constant 0 : i32
    %c0_i32_1 = arith.constant 0 : i32
    return %c0_i32, %c0_i32_0 : i32, i32
  }
  func.func @transform_3(%arg0: i32) -> (i32, i32) {
    %c0_i32 = arith.constant 0 : i32
    %c0_i32_0 = arith.constant 0 : i32
    %c0_i32_1 = arith.constant 0 : i32
    return %c0_i32, %c0_i32_0 : i32, i32
  }
  func.func @transform_4(%arg0: i32) -> (i32, i32) {
    %c0_i32 = arith.constant 0 : i32
    %c0_i32_0 = arith.constant 0 : i32
    %c0_i32_1 = arith.constant 0 : i32
    return %c0_i32, %c0_i32_0 : i32, i32
  }
  func.func @transform_5(%arg0: i32) -> (i32, i32) {
    %c0_i32 = arith.constant 0 : i32
    %c0_i32_0 = arith.constant 0 : i32
    %c0_i32_1 = arith.constant 0 : i32
    return %c0_i32, %c0_i32_0 : i32, i32
  }
  func.func @transform_6(%arg0: i32) -> (i32, i32) {
    %c0_i32 = arith.constant 0 : i32
    %c0_i32_0 = arith.constant 0 : i32
    %c0_i32_1 = arith.constant 0 : i32
    return %c0_i32, %c0_i32_0 : i32, i32
  }
  func.func @transform_7(%arg0: i32) -> (i32, i32) {
    %c0_i32 = arith.constant 0 : i32
    %c0_i32_0 = arith.constant 0 : i32
    return %arg0, %c0_i32 : i32, i32
  }
}

</mosaic_0001>

<llo_original>
// kernel: tpu_custom_call.1
$region0: #{tpu_custom_call.1}
  #allocation0 [shape = 'u32[]', space=smem, size = 0x4, offset = 0x4, fixed_abs, tag = 'smem constant byte address 0x4 - core index']
  #allocation1 [shape = 'u32[72,128]{1,0:T(1,128)}', space=vmem, size = 0x9000, scoped, tag = 'internal scratch']
  %s0 = inlined_call_operand.vmem [shape: f32[8,32], index: 0, kind: input, shape index: {}]
  %s1 = inlined_call_operand.vmem [shape: bf16[32,256], index: 1, kind: input, shape index: {}]
  %s2 = inlined_call_operand.vmem [shape: bf16[256,132], index: 2, kind: input, shape index: {}]
  %s3 = inlined_call_operand.vmem [shape: f32[4,512], index: 3, kind: input, shape index: {}]
  %s4 = inlined_call_operand.vmem [shape: s8[512,256], index: 4, kind: input, shape index: {}]
  %s5 = inlined_call_operand.vmem [shape: bf16[256,4], index: 5, kind: input, shape index: {}]
  %s6 = inlined_call_operand.vmem [shape: f32[8,512], index: 6, kind: input, shape index: {}]
  %s7 = inlined_call_operand.vmem [shape: f32[8,4], index: 7, kind: output, shape index: {}]
  %s8 = sld [smem:[#allocation0]]
  $region38: #{tpu_custom_call.1} parent=0
    _
  %s10 = ssub.s32 1, %s8
  %s11 = scalar_select 0, %s10, %s8
  // Predicated region
  $region2: #{tpu_custom_call.1} parent=0 // pred_check
    _
  $region3: #{tpu_custom_call.1} parent=0 // pred_check_branch
    %13 = sbr.rel (0) target = $region5
  $region4: #{tpu_custom_call.1} parent=0 // pred_region
    _
  $region5: #{tpu_custom_call.1} parent=0 // pred_fallthru
    _
  // Predicated region
  $region6: #{tpu_custom_call.1} parent=0 // pred_check
    _
  $region7: #{tpu_custom_call.1} parent=0 // pred_check_branch
    %15 = sbr.rel (0) target = $region9
  $region8: #{tpu_custom_call.1} parent=0 // pred_region
    _
  $region9: #{tpu_custom_call.1} parent=0 // pred_fallthru
    _
  // Predicated region
  $region10: #{tpu_custom_call.1} parent=0 // pred_check
    _
  $region11: #{tpu_custom_call.1} parent=0 // pred_check_branch
    %17 = sbr.rel (0) target = $region13
  $region12: #{tpu_custom_call.1} parent=0 // pred_region
    _
  $region13: #{tpu_custom_call.1} parent=0 // pred_fallthru
    _
  // Predicated region
  $region14: #{tpu_custom_call.1} parent=0 // pred_check
    _
  $region15: #{tpu_custom_call.1} parent=0 // pred_check_branch
    %19 = sbr.rel (0) target = $region17
  $region16: #{tpu_custom_call.1} parent=0 // pred_region
    _
  $region17: #{tpu_custom_call.1} parent=0 // pred_fallthru
    _
  // Predicated region
  $region18: #{tpu_custom_call.1} parent=0 // pred_check
    _
  $region19: #{tpu_custom_call.1} parent=0 // pred_check_branch
    %21 = sbr.rel (0) target = $region21
  $region20: #{tpu_custom_call.1} parent=0 // pred_region
    _
  $region21: #{tpu_custom_call.1} parent=0 // pred_fallthru
    _
  // Predicated region
  $region22: #{tpu_custom_call.1} parent=0 // pred_check
    _
  $region23: #{tpu_custom_call.1} parent=0 // pred_check_branch
    %23 = sbr.rel (0) target = $region25
  $region24: #{tpu_custom_call.1} parent=0 // pred_region
    _
  $region25: #{tpu_custom_call.1} parent=0 // pred_fallthru
    _
  // Predicated region
  $region26: #{tpu_custom_call.1} parent=0 // pred_check
    _
  $region27: #{tpu_custom_call.1} parent=0 // pred_check_branch
    %25 = sbr.rel (0) target = $region29
  $region28: #{tpu_custom_call.1} parent=0 // pred_region
    _
  $region29: #{tpu_custom_call.1} parent=0 // pred_fallthru
    _
  %v27 = vld [vmem:[%s6] ss:$8 sm:$0x3]
  %s28 = scalar_lea.vmem %s6, 1
  %v29 = vld [vmem:[%s28] ss:$8 sm:$0x3]
  %s30 = scalar_lea.vmem %s6, 2
  %v31 = vld [vmem:[%s30] ss:$8 sm:$0xf]
  %s32 = scalar_lea.vmem %s6, 3
  %v33 = vld [vmem:[%s32] ss:$8 sm:$0x3]
  %v34 = vld [vmem:[%s6 + $0x4] ss:$0 sm:$0xff]
  %s35 = scalar_lea.vmem %s6, 5
  %v36 = vld [vmem:[%s35] ss:$8 sm:$0x3]
  %v37 = vld [vmem:[%s0] sm:$0xff]
  %v38 = vpack.c.bf16 %v37, %v37
  %v39 = vld [vmem:[%s1] sm:$0xff]
  %v40 = vld [vmem:[%s1 + $0x8] sm:$0xff]
  %v41 = vld [vmem:[%s1 + $0x10] sm:$0xff]
  %v42 = vld [vmem:[%s1 + $0x18] sm:$0xff]
  %v44 = vperm.slane %v27, 0
  %v45 = vperm.slane %v27, 1
  %v52 = vunpack.c.l.b16 %v39
  %v53 = vunpack.c.h.b16 %v39
  %v54 = vunpack.c.l.b16 %v40
  %v55 = vunpack.c.h.b16 %v40
  %v56 = vunpack.c.l.b16 %v41
  %v57 = vunpack.c.h.b16 %v41
  %v58 = vunpack.c.l.b16 %v42
  %v59 = vunpack.c.h.b16 %v42
  %v60 = vpack.c.b16 %v54, %v52
  %v61 = vpack.c.b16 %v55, %v53
  %v62 = vpack.c.b16 %v58, %v56
  %v63 = vpack.c.b16 %v59, %v57
  %vm68 = vcmask 261120
  %v70 = vsel %vm68, %v38, 0
  %72 = vmatpush.bf16.msra.mxu0 0
  %73 = vmatpush.bf16.msra.mxu0 0
  %74 = vmatpush.bf16.msra.mxu0 0
  %75 = vmatpush.bf16.msra.mxu0 0
  %76 = vmatpush.bf16.msra.mxu0 0
  %77 = vmatpush.bf16.msra.mxu0 0
  %78 = vmatpush.bf16.msra.mxu0 %v62
  %79 = vmatpush.bf16.msra.mxu0 %v60
  %80 = vmatmul.bf16.gmra.mxu0 %v70
  %v81 = vpop.f32.mrf.mxu0
  %v82 = vadd.f32 %v44, %v81
  %v83 = vpop.f32.mrf.mxu0
  %84 = vdwg.mxu0
  %85 = vmatpush.bf16.msra.mxu0 0
  %86 = vmatpush.bf16.msra.mxu0 0
  %87 = vmatpush.bf16.msra.mxu0 0
  %88 = vmatpush.bf16.msra.mxu0 0
  %89 = vmatpush.bf16.msra.mxu0 0
  %90 = vmatpush.bf16.msra.mxu0 0
  %91 = vmatpush.bf16.msra.mxu0 %v63
  %92 = vmatpush.bf16.msra.mxu0 %v61
  %93 = vmatmul.bf16.gmra.mxu0 %v70
  %v94 = vpop.f32.mrf.mxu0
  %v95 = vadd.f32 %v45, %v94
  %v96 = vpop.f32.mrf.mxu0
  %97 = vdwg.mxu0
  %v98 = vmax.f32 %v82, 0.0
  %v99 = vmax.f32 %v95, 0.0
  %v100 = vpack.c.bf16 %v98, %v98
  %v101 = vpack.c.bf16 %v99, %v99
  %v102 = vld [vmem:[%s2] sm:$0xff]
  %v103 = vld [vmem:[%s2 + $0x8] sm:$0xff]
  %v104 = vld [vmem:[%s2 + $0x10] sm:$0xff]
  %v105 = vld [vmem:[%s2 + $0x18] sm:$0xff]
  %v106 = vld [vmem:[%s2 + $0x20] sm:$0xff]
  %v107 = vld [vmem:[%s2 + $0x28] sm:$0xff]
  %v108 = vld [vmem:[%s2 + $0x30] sm:$0xff]
  %v109 = vld [vmem:[%s2 + $0x38] sm:$0xff]
  %v110 = vld [vmem:[%s2 + $0x40] sm:$0xff]
  %v111 = vld [vmem:[%s2 + $0x48] sm:$0xff]
  %v112 = vld [vmem:[%s2 + $0x50] sm:$0xff]
  %v113 = vld [vmem:[%s2 + $0x58] sm:$0xff]
  %v114 = vld [vmem:[%s2 + $0x60] sm:$0xff]
  %v115 = vld [vmem:[%s2 + $0x68] sm:$0xff]
  %v116 = vld [vmem:[%s2 + $0x70] sm:$0xff]
  %v117 = vld [vmem:[%s2 + $0x78] sm:$0xff]
  %v118 = vld [vmem:[%s2 + $0x80] sm:$0xff]
  %v119 = vld [vmem:[%s2 + $0x88] sm:$0xff]
  %v120 = vld [vmem:[%s2 + $0x90] sm:$0xff]
  %v121 = vld [vmem:[%s2 + $0x98] sm:$0xff]
  %v122 = vld [vmem:[%s2 + $0xa0] sm:$0xff]
  %v123 = vld [vmem:[%s2 + $0xa8] sm:$0xff]
  %v124 = vld [vmem:[%s2 + $0xb0] sm:$0xff]
  %v125 = vld [vmem:[%s2 + $0xb8] sm:$0xff]
  %v126 = vld [vmem:[%s2 + $0xc0] sm:$0xff]
  %v127 = vld [vmem:[%s2 + $0xc8] sm:$0xff]
  %v128 = vld [vmem:[%s2 + $0xd0] sm:$0xff]
  %v129 = vld [vmem:[%s2 + $0xd8] sm:$0xff]
  %v130 = vld [vmem:[%s2 + $0xe0] sm:$0xff]
  %v131 = vld [vmem:[%s2 + $0xe8] sm:$0xff]
  %v132 = vld [vmem:[%s2 + $0xf0] sm:$0xff]
  %v133 = vld [vmem:[%s2 + $0xf8] sm:$0xff]
  %v135 = vperm.slane %v29, 0
  %v136 = vperm.slane %v29, 1
  %v171 = vunpack.c.l.b16 %v102
  %v172 = vunpack.c.h.b16 %v102
  %v173 = vunpack.c.l.b16 %v103
  %v174 = vunpack.c.h.b16 %v103
  %v175 = vunpack.c.l.b16 %v104
  %v176 = vunpack.c.h.b16 %v104
  %v177 = vunpack.c.l.b16 %v105
  %v178 = vunpack.c.h.b16 %v105
  %v179 = vunpack.c.l.b16 %v106
  %v180 = vunpack.c.h.b16 %v106
  %v181 = vunpack.c.l.b16 %v107
  %v182 = vunpack.c.h.b16 %v107
  %v183 = vunpack.c.l.b16 %v108
  %v184 = vunpack.c.h.b16 %v108
  %v185 = vunpack.c.l.b16 %v109
  %v186 = vunpack.c.h.b16 %v109
  %v187 = vunpack.c.l.b16 %v110
  %v188 = vunpack.c.h.b16 %v110
  %v189 = vunpack.c.l.b16 %v111
  %v190 = vunpack.c.h.b16 %v111
  %v191 = vunpack.c.l.b16 %v112
  %v192 = vunpack.c.h.b16 %v112
  %v193 = vunpack.c.l.b16 %v113
  %v194 = vunpack.c.h.b16 %v113
  %v195 = vunpack.c.l.b16 %v114
  %v196 = vunpack.c.h.b16 %v114
  %v197 = vunpack.c.l.b16 %v115
  %v198 = vunpack.c.h.b16 %v115
  %v199 = vunpack.c.l.b16 %v116
  %v200 = vunpack.c.h.b16 %v116
  %v201 = vunpack.c.l.b16 %v117
  %v202 = vunpack.c.h.b16 %v117
  %v203 = vunpack.c.l.b16 %v118
  %v204 = vunpack.c.h.b16 %v118
  %v205 = vunpack.c.l.b16 %v119
  %v206 = vunpack.c.h.b16 %v119
  %v207 = vunpack.c.l.b16 %v120
  %v208 = vunpack.c.h.b16 %v120
  %v209 = vunpack.c.l.b16 %v121
  %v210 = vunpack.c.h.b16 %v121
  %v211 = vunpack.c.l.b16 %v122
  %v212 = vunpack.c.h.b16 %v122
  %v213 = vunpack.c.l.b16 %v123
  %v214 = vunpack.c.h.b16 %v123
  %v215 = vunpack.c.l.b16 %v124
  %v216 = vunpack.c.h.b16 %v124
  %v217 = vunpack.c.l.b16 %v125
  %v218 = vunpack.c.h.b16 %v125
  %v219 = vunpack.c.l.b16 %v126
  %v220 = vunpack.c.h.b16 %v126
  %v221 = vunpack.c.l.b16 %v127
  %v222 = vunpack.c.h.b16 %v127
  %v223 = vunpack.c.l.b16 %v128
  %v224 = vunpack.c.h.b16 %v128
  %v225 = vunpack.c.l.b16 %v129
  %v226 = vunpack.c.h.b16 %v129
  %v227 = vunpack.c.l.b16 %v130
  %v228 = vunpack.c.h.b16 %v130
  %v229 = vunpack.c.l.b16 %v131
  %v230 = vunpack.c.h.b16 %v131
  %v231 = vunpack.c.l.b16 %v132
  %v232 = vunpack.c.h.b16 %v132
  %v233 = vunpack.c.l.b16 %v133
  %v234 = vunpack.c.h.b16 %v133
  %v235 = vpack.c.b16 %v173, %v171
  %v236 = vpack.c.b16 %v174, %v172
  %v237 = vpack.c.b16 %v177, %v175
  %v238 = vpack.c.b16 %v178, %v176
  %v239 = vpack.c.b16 %v181, %v179
  %v240 = vpack.c.b16 %v182, %v180
  %v241 = vpack.c.b16 %v185, %v183
  %v242 = vpack.c.b16 %v186, %v184
  %v243 = vpack.c.b16 %v189, %v187
  %v244 = vpack.c.b16 %v190, %v188
  %v245 = vpack.c.b16 %v193, %v191
  %v246 = vpack.c.b16 %v194, %v192
  %v247 = vpack.c.b16 %v197, %v195
  %v248 = vpack.c.b16 %v198, %v196
  %v249 = vpack.c.b16 %v201, %v199
  %v250 = vpack.c.b16 %v202, %v200
  %v251 = vpack.c.b16 %v205, %v203
  %v252 = vpack.c.b16 %v206, %v204
  %v253 = vpack.c.b16 %v209, %v207
  %v254 = vpack.c.b16 %v210, %v208
  %v255 = vpack.c.b16 %v213, %v211
  %v256 = vpack.c.b16 %v214, %v212
  %v257 = vpack.c.b16 %v217, %v215
  %v258 = vpack.c.b16 %v218, %v216
  %v259 = vpack.c.b16 %v221, %v219
  %v260 = vpack.c.b16 %v222, %v220
  %v261 = vpack.c.b16 %v225, %v223
  %v262 = vpack.c.b16 %v226, %v224
  %v263 = vpack.c.b16 %v229, %v227
  %v264 = vpack.c.b16 %v230, %v228
  %v265 = vpack.c.b16 %v233, %v231
  %v266 = vpack.c.b16 %v234, %v232
  %299 = vmatpush.bf16.msra.mxu0 %v249
  %300 = vmatpush.bf16.msra.mxu0 %v247
  %301 = vmatpush.bf16.msra.mxu0 %v245
  %302 = vmatpush.bf16.msra.mxu0 %v243
  %303 = vmatpush.bf16.msra.mxu0 %v241
  %304 = vmatpush.bf16.msra.mxu0 %v239
  %305 = vmatpush.bf16.msra.mxu0 %v237
  %306 = vmatpush.bf16.msra.mxu0 %v235
  %307 = vmatmul.bf16.gmra.mxu0 %v100
  %v308 = vpop.f32.mrf.mxu0
  %v309 = vadd.f32 %v135, %v308
  %v310 = vpop.f32.mrf.mxu0
  %311 = vdwg.mxu0
  %312 = vmatpush.bf16.msra.mxu0 %v265
  %313 = vmatpush.bf16.msra.mxu0 %v263
  %314 = vmatpush.bf16.msra.mxu0 %v261
  %315 = vmatpush.bf16.msra.mxu0 %v259
  %316 = vmatpush.bf16.msra.mxu0 %v257
  %317 = vmatpush.bf16.msra.mxu0 %v255
  %318 = vmatpush.bf16.msra.mxu0 %v253
  %319 = vmatpush.bf16.msra.mxu0 %v251
  %320 = vmatmul.bf16.gmra.mxu0 %v101
  %v321 = vpop.f32.mrf.mxu0
  %v322 = vadd.f32 %v309, %v321
  %v323 = vpop.f32.mrf.mxu0
  %324 = vdwg.mxu0
  %325 = vmatpush.bf16.msra.mxu0 %v250
  %326 = vmatpush.bf16.msra.mxu0 %v248
  %327 = vmatpush.bf16.msra.mxu0 %v246
  %328 = vmatpush.bf16.msra.mxu0 %v244
  %329 = vmatpush.bf16.msra.mxu0 %v242
  %330 = vmatpush.bf16.msra.mxu0 %v240
  %331 = vmatpush.bf16.msra.mxu0 %v238
  %332 = vmatpush.bf16.msra.mxu0 %v236
  %333 = vmatmul.bf16.gmra.mxu0 %v100
  %v334 = vpop.f32.mrf.mxu0
  %v335 = vadd.f32 %v136, %v334
  %v336 = vpop.f32.mrf.mxu0
  %337 = vdwg.mxu0
  %338 = vmatpush.bf16.msra.mxu0 %v266
  %339 = vmatpush.bf16.msra.mxu0 %v264
  %340 = vmatpush.bf16.msra.mxu0 %v262
  %341 = vmatpush.bf16.msra.mxu0 %v260
  %342 = vmatpush.bf16.msra.mxu0 %v258
  %343 = vmatpush.bf16.msra.mxu0 %v256
  %344 = vmatpush.bf16.msra.mxu0 %v254
  %345 = vmatpush.bf16.msra.mxu0 %v252
  %346 = vmatmul.bf16.gmra.mxu0 %v101
  %v347 = vpop.f32.mrf.mxu0
  %v348 = vadd.f32 %v335, %v347
  %v349 = vpop.f32.mrf.mxu0
  %350 = vdwg.mxu0
  %v351 = vmax.f32 %v322, 0.0
  %v352 = vmax.f32 %v348, 0.0
  %v353 = vlaneseq
  %v354 = vand.u32 %v353, 127
  %v355 = vadd.s32 %v354, 128
  %v356 = vld [vmem:[%s3] sm:$0xff]
  %v357 = vld [vmem:[%s3 + $0x8] sm:$0xff]
  %v359 = vperm.slane %v31, 0
  %v360 = vperm.slane %v31, 1
  %v361 = vperm.slane %v31, 2
  %v362 = vperm.slane %v31, 3
  %v367 = vadd.f32 %v359, 0.0
  %v368 = vadd.f32 %v360, 0.0
  %v369 = vadd.f32 %v361, 0.0
  %v370 = vadd.f32 %v362, 0.0
  %vm371 = vcmp.ge.s32.totalorder %v354, 0
  %vm372 = vcmp.ge.s32.totalorder %v355, 0
  %vm373 = vcmp.lt.s32.totalorder %v354, 33
  %vm374 = vcmp.lt.s32.totalorder %v355, 33
  %vm375 = vmand %vm371, %vm373
  %vm376 = vmand %vm372, %vm374
  %v377 = vsel %vm375, %v351, 0.0
  %v378 = vsel %vm376, %v352, 0.0
  %vm379 = vcmask 31744
  %v380 = vsel %vm379, %v378, -inf
  %v381 = vmax.f32 %v377, %v380
  %382 = vmax.xlane.f32.xlu0 %v381
  %v383 = vpop.xlane.xlu0 %382
  %v386 = vperm.slane %v356, 0
  %v387 = vperm.slane %v356, 4
  %v388 = vperm.slane %v357, 0
  %v389 = vperm.slane %v357, 4
  %v394 = vperm.slane %v386, 0
  %v395 = vperm.slane %v387, 0
  %v396 = vperm.slane %v388, 0
  %v397 = vperm.slane %v389, 0
  %v398 = vmul.f32 %v383, %v394
  %v399 = vmul.f32 %v383, %v395
  %v400 = vmul.f32 %v383, %v396
  %v401 = vmul.f32 %v383, %v397
  %v402 = vadd.f32 %v367, %v398
  %v403 = vadd.f32 %v368, %v399
  %v404 = vadd.f32 %v369, %v400
  %v405 = vadd.f32 %v370, %v401
  %vm406 = vcmp.ge.s32.totalorder %v354, 33
  %vm407 = vcmp.ge.s32.totalorder %v355, 33
  %vm408 = vcmp.lt.s32.totalorder %v354, 66
  %vm409 = vcmp.lt.s32.totalorder %v355, 66
  %vm410 = vmand %vm406, %vm408
  %vm411 = vmand %vm407, %vm409
  %v412 = vsel %vm410, %v351, 0.0
  %v413 = vsel %vm411, %v352, 0.0
  %v414 = vsel %vm379, %v413, -inf
  %v415 = vmax.f32 %v412, %v414
  %416 = vmax.xlane.f32.xlu0 %v415
  %v417 = vpop.xlane.xlu0 %416
  %v418 = vperm.slane %v356, 1
  %v419 = vperm.slane %v356, 5
  %v420 = vperm.slane %v357, 1
  %v421 = vperm.slane %v357, 5
  %v426 = vperm.slane %v418, 1
  %v427 = vperm.slane %v419, 1
  %v428 = vperm.slane %v420, 1
  %v429 = vperm.slane %v421, 1
  %v430 = vmul.f32 %v417, %v426
  %v431 = vmul.f32 %v417, %v427
  %v432 = vmul.f32 %v417, %v428
  %v433 = vmul.f32 %v417, %v429
  %v434 = vadd.f32 %v402, %v430
  %v435 = vadd.f32 %v403, %v431
  %v436 = vadd.f32 %v404, %v432
  %v437 = vadd.f32 %v405, %v433
  %vm438 = vcmp.ge.s32.totalorder %v354, 66
  %vm439 = vcmp.ge.s32.totalorder %v355, 66
  %vm440 = vcmp.lt.s32.totalorder %v354, 99
  %vm441 = vcmp.lt.s32.totalorder %v355, 99
  %vm442 = vmand %vm438, %vm440
  %vm443 = vmand %vm439, %vm441
  %v444 = vsel %vm442, %v351, 0.0
  %v445 = vsel %vm443, %v352, 0.0
  %v446 = vsel %vm379, %v445, -inf
  %v447 = vmax.f32 %v444, %v446
  %448 = vmax.xlane.f32.xlu0 %v447
  %v449 = vpop.xlane.xlu0 %448
  %v450 = vperm.slane %v356, 2
  %v451 = vperm.slane %v356, 6
  %v452 = vperm.slane %v357, 2
  %v453 = vperm.slane %v357, 6
  %v458 = vperm.slane %v450, 2
  %v459 = vperm.slane %v451, 2
  %v460 = vperm.slane %v452, 2
  %v461 = vperm.slane %v453, 2
  %v462 = vmul.f32 %v449, %v458
  %v463 = vmul.f32 %v449, %v459
  %v464 = vmul.f32 %v449, %v460
  %v465 = vmul.f32 %v449, %v461
  %v466 = vadd.f32 %v434, %v462
  %v467 = vadd.f32 %v435, %v463
  %v468 = vadd.f32 %v436, %v464
  %v469 = vadd.f32 %v437, %v465
  %vm470 = vcmp.ge.s32.totalorder %v354, 99
  %vm471 = vcmp.ge.s32.totalorder %v355, 99
  %vm472 = vcmp.lt.s32.totalorder %v354, 132
  %vm473 = vcmp.lt.s32.totalorder %v355, 132
  %vm474 = vmand %vm470, %vm472
  %vm475 = vmand %vm471, %vm473
  %v476 = vsel %vm474, %v351, 0.0
  %v477 = vsel %vm475, %v352, 0.0
  %v478 = vsel %vm379, %v477, -inf
  %v479 = vmax.f32 %v476, %v478
  %480 = vmax.xlane.f32.xlu0 %v479
  %v481 = vpop.xlane.xlu0 %480
  %v482 = vperm.slane %v356, 3
  %v483 = vperm.slane %v356, 7
  %v484 = vperm.slane %v357, 3
  %v485 = vperm.slane %v357, 7
  %v490 = vperm.slane %v482, 3
  %v491 = vperm.slane %v483, 3
  %v492 = vperm.slane %v484, 3
  %v493 = vperm.slane %v485, 3
  %v494 = vmul.f32 %v481, %v490
  %v495 = vmul.f32 %v481, %v491
  %v496 = vmul.f32 %v481, %v492
  %v497 = vmul.f32 %v481, %v493
  %v498 = vadd.f32 %v466, %v494
  %v499 = vadd.f32 %v467, %v495
  %v500 = vadd.f32 %v468, %v496
  %v501 = vadd.f32 %v469, %v497
  %v502 = vmax.f32 %v498, 0.0
  %v503 = vmax.f32 %v499, 0.0
  %v504 = vmax.f32 %v500, 0.0
  %v505 = vmax.f32 %v501, 0.0
  %v506 = vld [vmem:[%s4] sm:$0xff]
  %v507 = vld [vmem:[%s4 + $0x8] sm:$0xff]
  %v508 = vld [vmem:[%s4 + $0x10] sm:$0xff]
  %v509 = vld [vmem:[%s4 + $0x18] sm:$0xff]
  %v510 = vld [vmem:[%s4 + $0x20] sm:$0xff]
  %v511 = vld [vmem:[%s4 + $0x28] sm:$0xff]
  %v512 = vld [vmem:[%s4 + $0x30] sm:$0xff]
  %v513 = vld [vmem:[%s4 + $0x38] sm:$0xff]
  %v514 = vld [vmem:[%s4 + $0x40] sm:$0xff]
  %v515 = vld [vmem:[%s4 + $0x48] sm:$0xff]
  %v516 = vld [vmem:[%s4 + $0x50] sm:$0xff]
  %v517 = vld [vmem:[%s4 + $0x58] sm:$0xff]
  %v518 = vld [vmem:[%s4 + $0x60] sm:$0xff]
  %v519 = vld [vmem:[%s4 + $0x68] sm:$0xff]
  %v520 = vld [vmem:[%s4 + $0x70] sm:$0xff]
  %v521 = vld [vmem:[%s4 + $0x78] sm:$0xff]
  %v522 = vld [vmem:[%s4 + $0x80] sm:$0xff]
  %v523 = vld [vmem:[%s4 + $0x88] sm:$0xff]
  %v524 = vld [vmem:[%s4 + $0x90] sm:$0xff]
  %v525 = vld [vmem:[%s4 + $0x98] sm:$0xff]
  %v526 = vld [vmem:[%s4 + $0xa0] sm:$0xff]
  %v527 = vld [vmem:[%s4 + $0xa8] sm:$0xff]
  %v528 = vld [vmem:[%s4 + $0xb0] sm:$0xff]
  %v529 = vld [vmem:[%s4 + $0xb8] sm:$0xff]
  %v530 = vld [vmem:[%s4 + $0xc0] sm:$0xff]
  %v531 = vld [vmem:[%s4 + $0xc8] sm:$0xff]
  %v532 = vld [vmem:[%s4 + $0xd0] sm:$0xff]
  %v533 = vld [vmem:[%s4 + $0xd8] sm:$0xff]
  %v534 = vld [vmem:[%s4 + $0xe0] sm:$0xff]
  %v535 = vld [vmem:[%s4 + $0xe8] sm:$0xff]
  %v536 = vld [vmem:[%s4 + $0xf0] sm:$0xff]
  %v537 = vld [vmem:[%s4 + $0xf8] sm:$0xff]
  %v538 = vunpack.c.0.s8 %v506
  %v539 = vunpack.c.0.s8 %v507
  %v540 = vunpack.c.1.s8 %v506
  %v541 = vunpack.c.1.s8 %v507
  %v542 = vunpack.c.2.s8 %v506
  %v543 = vunpack.c.2.s8 %v507
  %v544 = vunpack.c.3.s8 %v506
  %v545 = vunpack.c.3.s8 %v507
  %v546 = vunpack.c.0.s8 %v508
  %v547 = vunpack.c.0.s8 %v509
  %v548 = vunpack.c.1.s8 %v508
  %v549 = vunpack.c.1.s8 %v509
  %v550 = vunpack.c.2.s8 %v508
  %v551 = vunpack.c.2.s8 %v509
  %v552 = vunpack.c.3.s8 %v508
  %v553 = vunpack.c.3.s8 %v509
  %v554 = vunpack.c.0.s8 %v510
  %v555 = vunpack.c.0.s8 %v511
  %v556 = vunpack.c.1.s8 %v510
  %v557 = vunpack.c.1.s8 %v511
  %v558 = vunpack.c.2.s8 %v510
  %v559 = vunpack.c.2.s8 %v511
  %v560 = vunpack.c.3.s8 %v510
  %v561 = vunpack.c.3.s8 %v511
  %v562 = vunpack.c.0.s8 %v512
  %v563 = vunpack.c.0.s8 %v513
  %v564 = vunpack.c.1.s8 %v512
  %v565 = vunpack.c.1.s8 %v513
  %v566 = vunpack.c.2.s8 %v512
  %v567 = vunpack.c.2.s8 %v513
  %v568 = vunpack.c.3.s8 %v512
  %v569 = vunpack.c.3.s8 %v513
  %v570 = vunpack.c.0.s8 %v514
  %v571 = vunpack.c.0.s8 %v515
  %v572 = vunpack.c.1.s8 %v514
  %v573 = vunpack.c.1.s8 %v515
  %v574 = vunpack.c.2.s8 %v514
  %v575 = vunpack.c.2.s8 %v515
  %v576 = vunpack.c.3.s8 %v514
  %v577 = vunpack.c.3.s8 %v515
  %v578 = vunpack.c.0.s8 %v516
  %v579 = vunpack.c.0.s8 %v517
  %v580 = vunpack.c.1.s8 %v516
  %v581 = vunpack.c.1.s8 %v517
  %v582 = vunpack.c.2.s8 %v516
  %v583 = vunpack.c.2.s8 %v517
  %v584 = vunpack.c.3.s8 %v516
  %v585 = vunpack.c.3.s8 %v517
  %v586 = vunpack.c.0.s8 %v518
  %v587 = vunpack.c.0.s8 %v519
  %v588 = vunpack.c.1.s8 %v518
  %v589 = vunpack.c.1.s8 %v519
  %v590 = vunpack.c.2.s8 %v518
  %v591 = vunpack.c.2.s8 %v519
  %v592 = vunpack.c.3.s8 %v518
  %v593 = vunpack.c.3.s8 %v519
  %v594 = vunpack.c.0.s8 %v520
  %v595 = vunpack.c.0.s8 %v521
  %v596 = vunpack.c.1.s8 %v520
  %v597 = vunpack.c.1.s8 %v521
  %v598 = vunpack.c.2.s8 %v520
  %v599 = vunpack.c.2.s8 %v521
  %v600 = vunpack.c.3.s8 %v520
  %v601 = vunpack.c.3.s8 %v521
  %v602 = vunpack.c.0.s8 %v522
  %v603 = vunpack.c.0.s8 %v523
  %v604 = vunpack.c.1.s8 %v522
  %v605 = vunpack.c.1.s8 %v523
  %v606 = vunpack.c.2.s8 %v522
  %v607 = vunpack.c.2.s8 %v523
  %v608 = vunpack.c.3.s8 %v522
  %v609 = vunpack.c.3.s8 %v523
  %v610 = vunpack.c.0.s8 %v524
  %v611 = vunpack.c.0.s8 %v525
  %v612 = vunpack.c.1.s8 %v524
  %v613 = vunpack.c.1.s8 %v525
  %v614 = vunpack.c.2.s8 %v524
  %v615 = vunpack.c.2.s8 %v525
  %v616 = vunpack.c.3.s8 %v524
  %v617 = vunpack.c.3.s8 %v525
  %v618 = vunpack.c.0.s8 %v526
  %v619 = vunpack.c.0.s8 %v527
  %v620 = vunpack.c.1.s8 %v526
  %v621 = vunpack.c.1.s8 %v527
  %v622 = vunpack.c.2.s8 %v526
  %v623 = vunpack.c.2.s8 %v527
  %v624 = vunpack.c.3.s8 %v526
  %v625 = vunpack.c.3.s8 %v527
  %v626 = vunpack.c.0.s8 %v528
  %v627 = vunpack.c.0.s8 %v529
  %v628 = vunpack.c.1.s8 %v528
  %v629 = vunpack.c.1.s8 %v529
  %v630 = vunpack.c.2.s8 %v528
  %v631 = vunpack.c.2.s8 %v529
  %v632 = vunpack.c.3.s8 %v528
  %v633 = vunpack.c.3.s8 %v529
  %v634 = vunpack.c.0.s8 %v530
  %v635 = vunpack.c.0.s8 %v531
  %v636 = vunpack.c.1.s8 %v530
  %v637 = vunpack.c.1.s8 %v531
  %v638 = vunpack.c.2.s8 %v530
  %v639 = vunpack.c.2.s8 %v531
  %v640 = vunpack.c.3.s8 %v530
  %v641 = vunpack.c.3.s8 %v531
  %v642 = vunpack.c.0.s8 %v532
  %v643 = vunpack.c.0.s8 %v533
  %v644 = vunpack.c.1.s8 %v532
  %v645 = vunpack.c.1.s8 %v533
  %v646 = vunpack.c.2.s8 %v532
  %v647 = vunpack.c.2.s8 %v533
  %v648 = vunpack.c.3.s8 %v532
  %v649 = vunpack.c.3.s8 %v533
  %v650 = vunpack.c.0.s8 %v534
  %v651 = vunpack.c.0.s8 %v535
  %v652 = vunpack.c.1.s8 %v534
  %v653 = vunpack.c.1.s8 %v535
  %v654 = vunpack.c.2.s8 %v534
  %v655 = vunpack.c.2.s8 %v535
  %v656 = vunpack.c.3.s8 %v534
  %v657 = vunpack.c.3.s8 %v535
  %v658 = vunpack.c.0.s8 %v536
  %v659 = vunpack.c.0.s8 %v537
  %v660 = vunpack.c.1.s8 %v536
  %v661 = vunpack.c.1.s8 %v537
  %v662 = vunpack.c.2.s8 %v536
  %v663 = vunpack.c.2.s8 %v537
  %v664 = vunpack.c.3.s8 %v536
  %v665 = vunpack.c.3.s8 %v537
  %v666 = vcvt.s32.f32 %v538
  %v667 = vcvt.s32.f32 %v539
  %v668 = vcvt.s32.f32 %v540
  %v669 = vcvt.s32.f32 %v541
  %v670 = vcvt.s32.f32 %v542
  %v671 = vcvt.s32.f32 %v543
  %v672 = vcvt.s32.f32 %v544
  %v673 = vcvt.s32.f32 %v545
  %v674 = vcvt.s32.f32 %v546
  %v675 = vcvt.s32.f32 %v547
  %v676 = vcvt.s32.f32 %v548
  %v677 = vcvt.s32.f32 %v549
  %v678 = vcvt.s32.f32 %v550
  %v679 = vcvt.s32.f32 %v551
  %v680 = vcvt.s32.f32 %v552
  %v681 = vcvt.s32.f32 %v553
  %v682 = vcvt.s32.f32 %v554
  %v683 = vcvt.s32.f32 %v555
  %v684 = vcvt.s32.f32 %v556
  %v685 = vcvt.s32.f32 %v557
  %v686 = vcvt.s32.f32 %v558
  %v687 = vcvt.s32.f32 %v559
  %v688 = vcvt.s32.f32 %v560
  %v689 = vcvt.s32.f32 %v561
  %v690 = vcvt.s32.f32 %v562
  %v691 = vcvt.s32.f32 %v563
  %v692 = vcvt.s32.f32 %v564
  %v693 = vcvt.s32.f32 %v565
  %v694 = vcvt.s32.f32 %v566
  %v695 = vcvt.s32.f32 %v567
  %v696 = vcvt.s32.f32 %v568
  %v697 = vcvt.s32.f32 %v569
  %v698 = vcvt.s32.f32 %v570
  %v699 = vcvt.s32.f32 %v571
  %v700 = vcvt.s32.f32 %v572
  %v701 = vcvt.s32.f32 %v573
  %v702 = vcvt.s32.f32 %v574
  %v703 = vcvt.s32.f32 %v575
  %v704 = vcvt.s32.f32 %v576
  %v705 = vcvt.s32.f32 %v577
  %v706 = vcvt.s32.f32 %v578
  %v707 = vcvt.s32.f32 %v579
  %v708 = vcvt.s32.f32 %v580
  %v709 = vcvt.s32.f32 %v581
  %v710 = vcvt.s32.f32 %v582
  %v711 = vcvt.s32.f32 %v583
  %v712 = vcvt.s32.f32 %v584
  %v713 = vcvt.s32.f32 %v585
  %v714 = vcvt.s32.f32 %v586
  %v715 = vcvt.s32.f32 %v587
  %v716 = vcvt.s32.f32 %v588
  %v717 = vcvt.s32.f32 %v589
  %v718 = vcvt.s32.f32 %v590
  %v719 = vcvt.s32.f32 %v591
  %v720 = vcvt.s32.f32 %v592
  %v721 = vcvt.s32.f32 %v593
  %v722 = vcvt.s32.f32 %v594
  %v723 = vcvt.s32.f32 %v595
  %v724 = vcvt.s32.f32 %v596
  %v725 = vcvt.s32.f32 %v597
  %v726 = vcvt.s32.f32 %v598
  %v727 = vcvt.s32.f32 %v599
  %v728 = vcvt.s32.f32 %v600
  %v729 = vcvt.s32.f32 %v601
  %v730 = vcvt.s32.f32 %v602
  %v731 = vcvt.s32.f32 %v603
  %v732 = vcvt.s32.f32 %v604
  %v733 = vcvt.s32.f32 %v605
  %v734 = vcvt.s32.f32 %v606
  %v735 = vcvt.s32.f32 %v607
  %v736 = vcvt.s32.f32 %v608
  %v737 = vcvt.s32.f32 %v609
  %v738 = vcvt.s32.f32 %v610
  %v739 = vcvt.s32.f32 %v611
  %v740 = vcvt.s32.f32 %v612
  %v741 = vcvt.s32.f32 %v613
  %v742 = vcvt.s32.f32 %v614
  %v743 = vcvt.s32.f32 %v615
  %v744 = vcvt.s32.f32 %v616
  %v745 = vcvt.s32.f32 %v617
  %v746 = vcvt.s32.f32 %v618
  %v747 = vcvt.s32.f32 %v619
  %v748 = vcvt.s32.f32 %v620
  %v749 = vcvt.s32.f32 %v621
  %v750 = vcvt.s32.f32 %v622
  %v751 = vcvt.s32.f32 %v623
  %v752 = vcvt.s32.f32 %v624
  %v753 = vcvt.s32.f32 %v625
  %v754 = vcvt.s32.f32 %v626
  %v755 = vcvt.s32.f32 %v627
  %v756 = vcvt.s32.f32 %v628
  %v757 = vcvt.s32.f32 %v629
  %v758 = vcvt.s32.f32 %v630
  %v759 = vcvt.s32.f32 %v631
  %v760 = vcvt.s32.f32 %v632
  %v761 = vcvt.s32.f32 %v633
  %v762 = vcvt.s32.f32 %v634
  %v763 = vcvt.s32.f32 %v635
  %v764 = vcvt.s32.f32 %v636
  %v765 = vcvt.s32.f32 %v637
  %v766 = vcvt.s32.f32 %v638
  %v767 = vcvt.s32.f32 %v639
  %v768 = vcvt.s32.f32 %v640
  %v769 = vcvt.s32.f32 %v641
  %v770 = vcvt.s32.f32 %v642
  %v771 = vcvt.s32.f32 %v643
  %v772 = vcvt.s32.f32 %v644
  %v773 = vcvt.s32.f32 %v645
  %v774 = vcvt.s32.f32 %v646
  %v775 = vcvt.s32.f32 %v647
  %v776 = vcvt.s32.f32 %v648
  %v777 = vcvt.s32.f32 %v649
  %v778 = vcvt.s32.f32 %v650
  %v779 = vcvt.s32.f32 %v651
  %v780 = vcvt.s32.f32 %v652
  %v781 = vcvt.s32.f32 %v653
  %v782 = vcvt.s32.f32 %v654
  %v783 = vcvt.s32.f32 %v655
  %v784 = vcvt.s32.f32 %v656
  %v785 = vcvt.s32.f32 %v657
  %v786 = vcvt.s32.f32 %v658
  %v787 = vcvt.s32.f32 %v659
  %v788 = vcvt.s32.f32 %v660
  %v789 = vcvt.s32.f32 %v661
  %v790 = vcvt.s32.f32 %v662
  %v791 = vcvt.s32.f32 %v663
  %v792 = vcvt.s32.f32 %v664
  %v793 = vcvt.s32.f32 %v665
  %v794 = vpack.c.bf16 %v668, %v666
  %v795 = vpack.c.bf16 %v669, %v667
  %v796 = vpack.c.bf16 %v672, %v670
  %v797 = vpack.c.bf16 %v673, %v671
  %v798 = vpack.c.bf16 %v676, %v674
  %v799 = vpack.c.bf16 %v677, %v675
  %v800 = vpack.c.bf16 %v680, %v678
  %v801 = vpack.c.bf16 %v681, %v679
  %v802 = vpack.c.bf16 %v684, %v682
  %v803 = vpack.c.bf16 %v685, %v683
  %v804 = vpack.c.bf16 %v688, %v686
  %v805 = vpack.c.bf16 %v689, %v687
  %v806 = vpack.c.bf16 %v692, %v690
  %v807 = vpack.c.bf16 %v693, %v691
  %v808 = vpack.c.bf16 %v696, %v694
  %v809 = vpack.c.bf16 %v697, %v695
  %v810 = vpack.c.bf16 %v700, %v698
  %v811 = vpack.c.bf16 %v701, %v699
  %v812 = vpack.c.bf16 %v704, %v702
  %v813 = vpack.c.bf16 %v705, %v703
  %v814 = vpack.c.bf16 %v708, %v706
  %v815 = vpack.c.bf16 %v709, %v707
  %v816 = vpack.c.bf16 %v712, %v710
  %v817 = vpack.c.bf16 %v713, %v711
  %v818 = vpack.c.bf16 %v716, %v714
  %v819 = vpack.c.bf16 %v717, %v715
  %v820 = vpack.c.bf16 %v720, %v718
  %v821 = vpack.c.bf16 %v721, %v719
  %v822 = vpack.c.bf16 %v724, %v722
  %v823 = vpack.c.bf16 %v725, %v723
  %v824 = vpack.c.bf16 %v728, %v726
  %v825 = vpack.c.bf16 %v729, %v727
  %v826 = vpack.c.bf16 %v732, %v730
  %v827 = vpack.c.bf16 %v733, %v731
  %v828 = vpack.c.bf16 %v736, %v734
  %v829 = vpack.c.bf16 %v737, %v735
  %v830 = vpack.c.bf16 %v740, %v738
  %v831 = vpack.c.bf16 %v741, %v739
  %v832 = vpack.c.bf16 %v744, %v742
  %v833 = vpack.c.bf16 %v745, %v743
  %v834 = vpack.c.bf16 %v748, %v746
  %v835 = vpack.c.bf16 %v749, %v747
  %v836 = vpack.c.bf16 %v752, %v750
  %v837 = vpack.c.bf16 %v753, %v751
  %v838 = vpack.c.bf16 %v756, %v754
  %v839 = vpack.c.bf16 %v757, %v755
  %v840 = vpack.c.bf16 %v760, %v758
  %v841 = vpack.c.bf16 %v761, %v759
  %v842 = vpack.c.bf16 %v764, %v762
  %v843 = vpack.c.bf16 %v765, %v763
  %v844 = vpack.c.bf16 %v768, %v766
  %v845 = vpack.c.bf16 %v769, %v767
  %v846 = vpack.c.bf16 %v772, %v770
  %v847 = vpack.c.bf16 %v773, %v771
  %v848 = vpack.c.bf16 %v776, %v774
  %v849 = vpack.c.bf16 %v777, %v775
  %v850 = vpack.c.bf16 %v780, %v778
  %v851 = vpack.c.bf16 %v781, %v779
  %v852 = vpack.c.bf16 %v784, %v782
  %v853 = vpack.c.bf16 %v785, %v783
  %v854 = vpack.c.bf16 %v788, %v786
  %v855 = vpack.c.bf16 %v789, %v787
  %v856 = vpack.c.bf16 %v792, %v790
  %v857 = vpack.c.bf16 %v793, %v791
  %v858 = vpack.c.bf16 %v502, %v502
  %v859 = vpack.c.bf16 %v503, %v503
  %v860 = vpack.c.bf16 %v504, %v504
  %v861 = vpack.c.bf16 %v505, %v505
  %862 = vmatpush.bf16.msra.mxu0 %v808
  %863 = vmatpush.bf16.msra.mxu0 %v806
  %864 = vmatpush.bf16.msra.mxu0 %v804
  %865 = vmatpush.bf16.msra.mxu0 %v802
  %866 = vmatpush.bf16.msra.mxu0 %v800
  %867 = vmatpush.bf16.msra.mxu0 %v798
  %868 = vmatpush.bf16.msra.mxu0 %v796
  %869 = vmatpush.bf16.msra.mxu0 %v794
  %870 = vmatmul.bf16.gmra.mxu0 %v858
  %v871 = vpop.f32.mrf.mxu0
  %v872 = vadd.f32 0.0, %v871
  %v873 = vpop.f32.mrf.mxu0
  %874 = vdwg.mxu0
  %875 = vmatpush.bf16.msra.mxu0 %v824
  %876 = vmatpush.bf16.msra.mxu0 %v822
  %877 = vmatpush.bf16.msra.mxu0 %v820
  %878 = vmatpush.bf16.msra.mxu0 %v818
  %879 = vmatpush.bf16.msra.mxu0 %v816
  %880 = vmatpush.bf16.msra.mxu0 %v814
  %881 = vmatpush.bf16.msra.mxu0 %v812
  %882 = vmatpush.bf16.msra.mxu0 %v810
  %883 = vmatmul.bf16.gmra.mxu0 %v859
  %v884 = vpop.f32.mrf.mxu0
  %v885 = vadd.f32 %v872, %v884
  %v886 = vpop.f32.mrf.mxu0
  %887 = vdwg.mxu0
  %888 = vmatpush.bf16.msra.mxu0 %v840
  %889 = vmatpush.bf16.msra.mxu0 %v838
  %890 = vmatpush.bf16.msra.mxu0 %v836
  %891 = vmatpush.bf16.msra.mxu0 %v834
  %892 = vmatpush.bf16.msra.mxu0 %v832
  %893 = vmatpush.bf16.msra.mxu0 %v830
  %894 = vmatpush.bf16.msra.mxu0 %v828
  %895 = vmatpush.bf16.msra.mxu0 %v826
  %896 = vmatmul.bf16.gmra.mxu0 %v860
  %v897 = vpop.f32.mrf.mxu0
  %v898 = vadd.f32 %v885, %v897
  %v899 = vpop.f32.mrf.mxu0
  %900 = vdwg.mxu0
  %901 = vmatpush.bf16.msra.mxu0 %v856
  %902 = vmatpush.bf16.msra.mxu0 %v854
  %903 = vmatpush.bf16.msra.mxu0 %v852
  %904 = vmatpush.bf16.msra.mxu0 %v850
  %905 = vmatpush.bf16.msra.mxu0 %v848
  %906 = vmatpush.bf16.msra.mxu0 %v846
  %907 = vmatpush.bf16.msra.mxu0 %v844
  %908 = vmatpush.bf16.msra.mxu0 %v842
  %909 = vmatmul.bf16.gmra.mxu0 %v861
  %v910 = vpop.f32.mrf.mxu0
  %v911 = vadd.f32 %v898, %v910
  %v912 = vpop.f32.mrf.mxu0
  %913 = vdwg.mxu0
  %914 = vmatpush.bf16.msra.mxu0 %v809
  %915 = vmatpush.bf16.msra.mxu0 %v807
  %916 = vmatpush.bf16.msra.mxu0 %v805
  %917 = vmatpush.bf16.msra.mxu0 %v803
  %918 = vmatpush.bf16.msra.mxu0 %v801
  %919 = vmatpush.bf16.msra.mxu0 %v799
  %920 = vmatpush.bf16.msra.mxu0 %v797
  %921 = vmatpush.bf16.msra.mxu0 %v795
  %922 = vmatmul.bf16.gmra.mxu0 %v858
  %v923 = vpop.f32.mrf.mxu0
  %v924 = vadd.f32 0.0, %v923
  %v925 = vpop.f32.mrf.mxu0
  %926 = vdwg.mxu0
  %927 = vmatpush.bf16.msra.mxu0 %v825
  %928 = vmatpush.bf16.msra.mxu0 %v823
  %929 = vmatpush.bf16.msra.mxu0 %v821
  %930 = vmatpush.bf16.msra.mxu0 %v819
  %931 = vmatpush.bf16.msra.mxu0 %v817
  %932 = vmatpush.bf16.msra.mxu0 %v815
  %933 = vmatpush.bf16.msra.mxu0 %v813
  %934 = vmatpush.bf16.msra.mxu0 %v811
  %935 = vmatmul.bf16.gmra.mxu0 %v859
  %v936 = vpop.f32.mrf.mxu0
  %v937 = vadd.f32 %v924, %v936
  %v938 = vpop.f32.mrf.mxu0
  %939 = vdwg.mxu0
  %940 = vmatpush.bf16.msra.mxu0 %v841
  %941 = vmatpush.bf16.msra.mxu0 %v839
  %942 = vmatpush.bf16.msra.mxu0 %v837
  %943 = vmatpush.bf16.msra.mxu0 %v835
  %944 = vmatpush.bf16.msra.mxu0 %v833
  %945 = vmatpush.bf16.msra.mxu0 %v831
  %946 = vmatpush.bf16.msra.mxu0 %v829
  %947 = vmatpush.bf16.msra.mxu0 %v827
  %948 = vmatmul.bf16.gmra.mxu0 %v860
  %v949 = vpop.f32.mrf.mxu0
  %v950 = vadd.f32 %v937, %v949
  %v951 = vpop.f32.mrf.mxu0
  %952 = vdwg.mxu0
  %953 = vmatpush.bf16.msra.mxu0 %v857
  %954 = vmatpush.bf16.msra.mxu0 %v855
  %955 = vmatpush.bf16.msra.mxu0 %v853
  %956 = vmatpush.bf16.msra.mxu0 %v851
  %957 = vmatpush.bf16.msra.mxu0 %v849
  %958 = vmatpush.bf16.msra.mxu0 %v847
  %959 = vmatpush.bf16.msra.mxu0 %v845
  %960 = vmatpush.bf16.msra.mxu0 %v843
  %961 = vmatmul.bf16.gmra.mxu0 %v861
  %v962 = vpop.f32.mrf.mxu0
  %v963 = vadd.f32 %v950, %v962
  %v964 = vpop.f32.mrf.mxu0
  %965 = vdwg.mxu0
  %v967 = vperm.slane %v36, 0
  %v968 = vperm.slane %v36, 1
  %v971 = vmul.f32 %v911, %v967
  %v972 = vmul.f32 %v963, %v968
  %v974 = vperm.slane %v33, 0
  %v975 = vperm.slane %v33, 1
  %v978 = vadd.f32 %v971, %v974
  %v979 = vadd.f32 %v972, %v975
  %v980 = vmax.f32 %v978, 0.0
  %v981 = vmax.f32 %v979, 0.0
  %v982 = vpack.c.bf16 %v980, %v980
  %v983 = vpack.c.bf16 %v981, %v981
  %v984 = vld [vmem:[%s5] sm:$0xf]
  %v985 = vld [vmem:[%s5 + $0x4] sm:$0xf]
  %v986 = vld [vmem:[%s5 + $0x8] sm:$0xf]
  %v987 = vld [vmem:[%s5 + $0xc] sm:$0xf]
  %v988 = vld [vmem:[%s5 + $0x10] sm:$0xf]
  %v989 = vld [vmem:[%s5 + $0x14] sm:$0xf]
  %v990 = vld [vmem:[%s5 + $0x18] sm:$0xf]
  %v991 = vld [vmem:[%s5 + $0x1c] sm:$0xf]
  %v992 = vld [vmem:[%s5 + $0x20] sm:$0xf]
  %v993 = vld [vmem:[%s5 + $0x24] sm:$0xf]
  %v994 = vld [vmem:[%s5 + $0x28] sm:$0xf]
  %v995 = vld [vmem:[%s5 + $0x2c] sm:$0xf]
  %v996 = vld [vmem:[%s5 + $0x30] sm:$0xf]
  %v997 = vld [vmem:[%s5 + $0x34] sm:$0xf]
  %v998 = vld [vmem:[%s5 + $0x38] sm:$0xf]
  %v999 = vld [vmem:[%s5 + $0x3c] sm:$0xf]
  %v1000 = vld [vmem:[%s5 + $0x40] sm:$0xf]
  %v1001 = vld [vmem:[%s5 + $0x44] sm:$0xf]
  %v1002 = vld [vmem:[%s5 + $0x48] sm:$0xf]
  %v1003 = vld [vmem:[%s5 + $0x4c] sm:$0xf]
  %v1004 = vld [vmem:[%s5 + $0x50] sm:$0xf]
  %v1005 = vld [vmem:[%s5 + $0x54] sm:$0xf]
  %v1006 = vld [vmem:[%s5 + $0x58] sm:$0xf]
  %v1007 = vld [vmem:[%s5 + $0x5c] sm:$0xf]
  %v1008 = vld [vmem:[%s5 + $0x60] sm:$0xf]
  %v1009 = vld [vmem:[%s5 + $0x64] sm:$0xf]
  %v1010 = vld [vmem:[%s5 + $0x68] sm:$0xf]
  %v1011 = vld [vmem:[%s5 + $0x6c] sm:$0xf]
  %v1012 = vld [vmem:[%s5 + $0x70] sm:$0xf]
  %v1013 = vld [vmem:[%s5 + $0x74] sm:$0xf]
  %v1014 = vld [vmem:[%s5 + $0x78] sm:$0xf]
  %v1015 = vld [vmem:[%s5 + $0x7c] sm:$0xf]
  %v1048 = vunpack.c.l.b16 %v984
  %v1049 = vunpack.c.l.b16 %v985
  %v1050 = vunpack.c.l.b16 %v986
  %v1051 = vunpack.c.l.b16 %v987
  %v1052 = vunpack.c.l.b16 %v988
  %v1053 = vunpack.c.l.b16 %v989
  %v1054 = vunpack.c.l.b16 %v990
  %v1055 = vunpack.c.l.b16 %v991
  %v1056 = vunpack.c.l.b16 %v992
  %v1057 = vunpack.c.l.b16 %v993
  %v1058 = vunpack.c.l.b16 %v994
  %v1059 = vunpack.c.l.b16 %v995
  %v1060 = vunpack.c.l.b16 %v996
  %v1061 = vunpack.c.l.b16 %v997
  %v1062 = vunpack.c.l.b16 %v998
  %v1063 = vunpack.c.l.b16 %v999
  %v1064 = vunpack.c.l.b16 %v1000
  %v1065 = vunpack.c.l.b16 %v1001
  %v1066 = vunpack.c.l.b16 %v1002
  %v1067 = vunpack.c.l.b16 %v1003
  %v1068 = vunpack.c.l.b16 %v1004
  %v1069 = vunpack.c.l.b16 %v1005
  %v1070 = vunpack.c.l.b16 %v1006
  %v1071 = vunpack.c.l.b16 %v1007
  %v1072 = vunpack.c.l.b16 %v1008
  %v1073 = vunpack.c.l.b16 %v1009
  %v1074 = vunpack.c.l.b16 %v1010
  %v1075 = vunpack.c.l.b16 %v1011
  %v1076 = vunpack.c.l.b16 %v1012
  %v1077 = vunpack.c.l.b16 %v1013
  %v1078 = vunpack.c.l.b16 %v1014
  %v1079 = vunpack.c.l.b16 %v1015
  %v1080 = vpack.c.b16 %v1049, %v1048
  %v1081 = vpack.c.b16 %v1051, %v1050
  %v1082 = vpack.c.b16 %v1053, %v1052
  %v1083 = vpack.c.b16 %v1055, %v1054
  %v1084 = vpack.c.b16 %v1057, %v1056
  %v1085 = vpack.c.b16 %v1059, %v1058
  %v1086 = vpack.c.b16 %v1061, %v1060
  %v1087 = vpack.c.b16 %v1063, %v1062
  %v1088 = vpack.c.b16 %v1065, %v1064
  %v1089 = vpack.c.b16 %v1067, %v1066
  %v1090 = vpack.c.b16 %v1069, %v1068
  %v1091 = vpack.c.b16 %v1071, %v1070
  %v1092 = vpack.c.b16 %v1073, %v1072
  %v1093 = vpack.c.b16 %v1075, %v1074
  %v1094 = vpack.c.b16 %v1077, %v1076
  %v1095 = vpack.c.b16 %v1079, %v1078
  %1112 = vmatpush.bf16.msra.mxu0 %v1087
  %1113 = vmatpush.bf16.msra.mxu0 %v1086
  %1114 = vmatpush.bf16.msra.mxu0 %v1085
  %1115 = vmatpush.bf16.msra.mxu0 %v1084
  %1116 = vmatpush.bf16.msra.mxu0 %v1083
  %1117 = vmatpush.bf16.msra.mxu0 %v1082
  %1118 = vmatpush.bf16.msra.mxu0 %v1081
  %1119 = vmatpush.bf16.msra.mxu0 %v1080
  %1120 = vmatmul.bf16.gmra.mxu0 %v982
  %v1121 = vpop.f32.mrf.mxu0
  %v1122 = vadd.f32 %v34, %v1121
  %v1123 = vpop.f32.mrf.mxu0
  %1124 = vdwg.mxu0
  %1125 = vmatpush.bf16.msra.mxu0 %v1095
  %1126 = vmatpush.bf16.msra.mxu0 %v1094
  %1127 = vmatpush.bf16.msra.mxu0 %v1093
  %1128 = vmatpush.bf16.msra.mxu0 %v1092
  %1129 = vmatpush.bf16.msra.mxu0 %v1091
  %1130 = vmatpush.bf16.msra.mxu0 %v1090
  %1131 = vmatpush.bf16.msra.mxu0 %v1089
  %1132 = vmatpush.bf16.msra.mxu0 %v1088
  %1133 = vmatmul.bf16.gmra.mxu0 %v983
  %v1134 = vpop.f32.mrf.mxu0
  %v1135 = vadd.f32 %v1122, %v1134
  %v1136 = vpop.f32.mrf.mxu0
  %1137 = vdwg.mxu0
  %v1138 = vsel %vm379, %v1135, -inf
  %1139 = vmax.xlane.f32.xlu0 %v1138
  %v1140 = vpop.xlane.xlu0 %1139
  %v1141 = vsub.f32 %v1135, %v1140
  %v1142 = vmul.f32 %v1141, 1.442695
  %v1143 = vpow.pop %v1142
  %v1144 = vsel %vm379, %v1143, 0.0
  %1145 = vadd.xlane.f32.xlu0 %v1144
  %v1146 = vpop.xlane.xlu0 %1145
  %v1147 = vlog2.pop %v1146
  %v1148 = vmul.f32 %v1147, 0.6931472
  %v1149 = vsub.f32 %v1141, %v1148
  %1150 = vst.msk [vmem:[%s7] sm:$0xff] %vm379, %v1149
  // Predicated region
  $region30: #{tpu_custom_call.1} parent=0 // pred_check
    _
  $region31: #{tpu_custom_call.1} parent=0 // pred_check_branch
    %1152 = sbr.rel (0) target = $region33
  $region32: #{tpu_custom_call.1} parent=0 // pred_region
    _
  $region33: #{tpu_custom_call.1} parent=0 // pred_fallthru
    _
  // Predicated region
  $region34: #{tpu_custom_call.1} parent=0 // pred_check
    _
  $region35: #{tpu_custom_call.1} parent=0 // pred_check_branch
    %1154 = sbr.rel (0) target = $region37
  $region36: #{tpu_custom_call.1} parent=0 // pred_region
    _
  $region37: #{tpu_custom_call.1} parent=0 // pred_fallthru
    _

</llo_original>
